<compile_context>
chip_gen: v6e
topology: v6e:2x2x1
jax: 0.10.0
libtpu: 0.0.40
codegen_flags: <defaults>
</compile_context>

<pallas_src>
import jax
import jax.numpy as jnp
from jax.experimental import pallas as pl
from jax.experimental.pallas import tpu as pltpu


def _make_normalize_kernel(n_valid, needs_mask, inv_n):
    """Build a kernel for blocks of shape (TB, R, 128)."""

    def kernel(x_ref, o_ref):
        a = x_ref[...].astype(jnp.float32)  # (TB, R, 128)

        if needs_mask:
            # Mask out zero-padding beyond the real sample length n_valid.
            row = jax.lax.broadcasted_iota(jnp.int32, a.shape, 1)
            lane = jax.lax.broadcasted_iota(jnp.int32, a.shape, 2)
            idx = row * 128 + lane
            valid = idx < n_valid
            a_max = jnp.where(valid, a, jnp.float32(-jnp.inf))
            a_min = jnp.where(valid, a, jnp.float32(jnp.inf))
            a_sum = jnp.where(valid, a, jnp.float32(0.0))
        else:
            a_max = a
            a_min = a
            a_sum = a

        # Per-sample reductions over the flattened (R, 128) slab.
        mx = jnp.max(a_max, axis=(1, 2), keepdims=True)     # (TB, 1, 1)
        mn = jnp.min(a_min, axis=(1, 2), keepdims=True)     # (TB, 1, 1)
        mid = jnp.sum(a_sum, axis=(1, 2), keepdims=True) * jnp.float32(inv_n)

        # Exact divide only on the tiny (TB,1,1) tensor; the per-element path
        # is just a broadcasted sub + mul on the VPU.
        scale = jnp.float32(1.0) / (mx - mn)
        o_ref[...] = ((a - mid) * scale).astype(o_ref.dtype)

    return kernel


def _choose_tb(batch, sample_bytes):
    """Pick samples-per-grid-step (TB)."""
    # Keep in+out, double-buffered, under a budget that is safe on every
    # generation (v7x has only 64 MiB VMEM / TC, 32 MiB default scoped limit).
    budget = 24 * 1024 * 1024
    max_tb_mem = max(1, budget // (4 * max(1, sample_bytes)))
    # Prefer >= 2 grid steps so the "parallel" batch axis can shard across the
    # two TensorCores on v7x (no-op on v5e/v6e).
    cap = batch // 2 if batch >= 2 else 1
    tb = min(batch, max_tb_mem, max(cap, 1))
    tb = max(tb, 1)
    while tb > 1 and batch % tb != 0:
        tb -= 1
    return tb


def normalize(x):
    """x: (B, ...) array. Per-sample normalize, same shape/dtype as input."""
    orig_shape = x.shape
    orig_dtype = x.dtype
    B = x.shape[0]
    N = 1
    for d in x.shape[1:]:
        N *= d

    itemsize = jnp.dtype(orig_dtype).itemsize
    # Sublane multiple: 8 for 32-bit, 16 for 16-bit, 32 for 8-bit dtypes.
    row_mult = 8 * max(1, 4 // itemsize)
    chunk = row_mult * 128
    Npad = ((N + chunk - 1) // chunk) * chunk
    needs_mask = Npad != N

    x2 = x.reshape(B, N)
    if needs_mask:
        x2 = jnp.pad(x2, ((0, 0), (0, Npad - N)))
    R = Npad // 128
    x3 = x2.reshape(B, R, 128)  # lane/sublane-dense per-sample slab

    TB = _choose_tb(B, Npad * itemsize)
    grid = (B // TB,)

    # VMEM: double-buffered input + output tiles, plus headroom. Cap at 48 MiB
    # which is still within v7x's 64 MiB physical VMEM.
    tile_bytes = TB * Npad * itemsize
    vmem_limit = min(max(32 * 1024 * 1024, 4 * tile_bytes + 4 * 1024 * 1024),
                     48 * 1024 * 1024)

    kernel = _make_normalize_kernel(N, needs_mask, 1.0 / float(N))

    out = pl.pallas_call(
        kernel,
        out_shape=jax.ShapeDtypeStruct((B, R, 128), orig_dtype),
        grid_spec=pltpu.PrefetchScalarGridSpec(
            num_scalar_prefetch=0,
            grid=grid,
            in_specs=[pl.BlockSpec((TB, R, 128), lambda i: (i, 0, 0))],
            out_specs=pl.BlockSpec((TB, R, 128), lambda i: (i, 0, 0)),
        ),
        compiler_params=pltpu.CompilerParams(
            dimension_semantics=("parallel",),
            vmem_limit_bytes=vmem_limit,
        ),
    )(x3)

    out = out.reshape(B, Npad)
    if needs_mask:
        out = out[:, :N]
    return out.reshape(orig_shape)


def normalize_ref(x):
    """Pure-JAX reference mirroring the PyTorch forward."""
    B = x.shape[0]
    x2 = x.reshape(B, -1).astype(jnp.float32)
    mx = jnp.max(x2, axis=1, keepdims=True)
    mn = jnp.min(x2, axis=1, keepdims=True)
    mid = jnp.mean(x2, axis=1, keepdims=True)
    return (((x2 - mid) / (mx - mn)).astype(x.dtype)).reshape(x.shape)


if __name__ == "__main__":
    key = jax.random.PRNGKey(0)
    x = jax.random.normal(key, (2, 4, 16, 16), dtype=jnp.float32)

    y = normalize(x)
    y = jax.block_until_ready(y)

    y_ref = normalize_ref(x)
    assert y.shape == x.shape and y.dtype == x.dtype
    assert jnp.allclose(y, y_ref, atol=1e-5, rtol=1e-5)

    # Also exercise a non-128-aligned sample size (masked-padding path).
    x_odd = jax.random.normal(jax.random.PRNGKey(1), (3, 5, 7, 9), dtype=jnp.float32)
    y_odd = jax.block_until_ready(normalize(x_odd))
    assert jnp.allclose(y_odd, normalize_ref(x_odd), atol=1e-5, rtol=1e-5)

    print("KERNEL_OK")
</pallas_src>

<mosaic_0001>
module attributes {stable_mosaic.version = 11 : i64} {
  func.func @kernel(%arg0: i32, %arg1: memref<1x8x128xf32, #tpu.memory_space<vmem>>, %arg2: memref<1x8x128xf32, #tpu.memory_space<vmem>>) attributes {dimension_semantics = [#tpu.dimension_semantics<parallel>], iteration_bounds = array<i64: 2>, scalar_prefetch = 0 : i64, scratch_operands = 0 : i64, tpu.core_type = #tpu.core_type<tc>, window_params = [{transform_indices = @transform_0, window_bounds = array<i64: 1, 8, 128>}, {transform_indices = @transform_1, window_bounds = array<i64: 1, 8, 128>}]} {
    %c0 = arith.constant 0 : index
    %c0_0 = arith.constant 0 : index
    %c0_1 = arith.constant 0 : index
    %0 = vector.load %arg1[%c0, %c0_0, %c0_1] : memref<1x8x128xf32, #tpu.memory_space<vmem>>, vector<1x8x128xf32>
    %cst = arith.constant dense<0xFF800000> : vector<1xf32>
    %1 = vector.multi_reduction <maximumf>, %0, %cst [1, 2] : vector<1x8x128xf32> to vector<1xf32>
    %2 = vector.shape_cast %1 : vector<1xf32> to vector<1x1x1xf32>
    %cst_2 = arith.constant dense<0x7F800000> : vector<1xf32>
    %3 = vector.multi_reduction <minimumf>, %0, %cst_2 [1, 2] : vector<1x8x128xf32> to vector<1xf32>
    %4 = vector.shape_cast %3 : vector<1xf32> to vector<1x1x1xf32>
    %cst_3 = arith.constant dense<0.000000e+00> : vector<1xf32>
    %5 = vector.multi_reduction <add>, %0, %cst_3 [1, 2] : vector<1x8x128xf32> to vector<1xf32>
    %6 = vector.shape_cast %5 : vector<1xf32> to vector<1x1x1xf32>
    %cst_4 = arith.constant 9.765625E-4 : f32
    %7 = vector.broadcast %cst_4 : f32 to vector<1x1x1xf32>
    %8 = arith.mulf %6, %7 : vector<1x1x1xf32>
    %9 = arith.subf %2, %4 : vector<1x1x1xf32>
    %cst_5 = arith.constant 1.000000e+00 : f32
    %10 = vector.broadcast %cst_5 : f32 to vector<1x1x1xf32>
    %11 = arith.divf %10, %9 : vector<1x1x1xf32>
    %12 = vector.broadcast %8 : vector<1x1x1xf32> to vector<1x8x128xf32>
    %13 = arith.subf %0, %12 : vector<1x8x128xf32>
    %14 = vector.broadcast %11 : vector<1x1x1xf32> to vector<1x8x128xf32>
    %15 = arith.mulf %13, %14 : vector<1x8x128xf32>
    %c0_6 = arith.constant 0 : index
    %c0_7 = arith.constant 0 : index
    %c0_8 = arith.constant 0 : index
    %16 = vector.load %arg2[%c0_6, %c0_7, %c0_8] : memref<1x8x128xf32, #tpu.memory_space<vmem>>, vector<1x8x128xf32>
    tpu.vector_store %arg2[%c0_6, %c0_7, %c0_8], %15 {strides = array<i32>} : memref<1x8x128xf32, #tpu.memory_space<vmem>>, vector<1x8x128xf32>,
    return
  }
  func.func @transform_0(%arg0: i32) -> (i32, i32, i32) {
    %c0_i32 = arith.constant 0 : i32
    %c0_i32_0 = arith.constant 0 : i32
    %c0_i32_1 = arith.constant 0 : i32
    return %arg0, %c0_i32, %c0_i32_0 : i32, i32, i32
  }
  func.func @transform_1(%arg0: i32) -> (i32, i32, i32) {
    %c0_i32 = arith.constant 0 : i32
    %c0_i32_0 = arith.constant 0 : i32
    %c0_i32_1 = arith.constant 0 : i32
    return %arg0, %c0_i32, %c0_i32_0 : i32, i32, i32
  }
}

</mosaic_0001>

<llo_original>
// kernel: tpu_custom_call.1
$region0: #{tpu_custom_call.1}
  #allocation0 [shape = 'u32[]', space=smem, size = 0x4, offset = 0x4, fixed_abs, tag = 'smem constant byte address 0x4 - core index']
  #allocation1 [shape = 'u32[144,128]{1,0:T(1,128)}', space=vmem, size = 0x12000, scoped, tag = 'internal scratch']
  %s0 = inlined_call_operand.hbm [shape: f32[2,8,128], index: 0, kind: input, shape index: {}]
  %s1 = inlined_call_operand.hbm [shape: f32[2,8,128], index: 1, kind: output, shape index: {}]
  %s2 = sld [smem:[#allocation0]]
  $region41: #{tpu_custom_call.1} parent=0
    _
  %s4 = ssub.s32 1, %s2
  %s5 = scalar_select 0, %s4, %s2
  $region1: #{tpu_custom_call.1} parent=0
    #allocation2 [shape = 'u8[8192]{0}', space=vmem, size = 0x2000, scoped, tag = 'input window, operand 0']
    #allocation3 [shape = 's32[2]{0}', space=sflag, size = 0x8, scoped, tag = 'scoped memory for tpu_custom_call.1']
    #allocation4 [shape = 's32[2]{0}', space=sflag, size = 0x8, scoped, tag = 'scoped memory for tpu_custom_call.1']
    #allocation5 [shape = 'u8[8192]{0}', space=vmem, size = 0x2000, scoped, tag = 'output window, operand 0']
    %6 = vsyncpa [#allocation3], 0
    %s7 = scalar_lea.sflag [#allocation3], 1
    %8 = vsyncpa %s7, 0
    %9 = vsyncpa [#allocation4], 0
    %s10 = scalar_lea.sflag [#allocation4], 1
    %11 = vsyncpa %s10, 0
    loop: start=0, step=1, limit=4
    $region2: #{tpu_custom_call.1} parent=1 // loop_pre_header
      _
    $region3: #{tpu_custom_call.1} parent=1 // loop_header
      %s13 = sphi 0, %s17
      %p14 = scmp.ge.s32.totalorder %s13, 4
      %s23 = sphi 0, %s25
      %s26 = sphi 0, %s23
      %s27 = sphi 0, %s26
      %s43 = sphi 0, %s27
      %s49 = sphi 0, %s51
      %s52 = sphi 0, %s49
      %s53 = sphi 0, %s52
      %s69 = sphi 0, %s53
    $region4: #{tpu_custom_call.1} parent=1 // loop_header_branch
      %16 = sbr.rel (%p14) target = $region8
    $region5: #{tpu_custom_call.1} parent=1 // loop_body
      %s18 = ssub.s32 %s13, 1
      %s19 = ssub.s32 %s13, 2
      %s20 = sadd.s32 %s13, 1
      %s21 = ssub.s32 %s13, %s20
      %p22 = scmp.eq.s32.totalorder %s21, 0
      %s24 = sadd.s32 %s23, 1
      %s25 = scalar_select %p22, %s23, %s24
      %p28 = pneg %p22
      %p29 = scmp.eq.s32.totalorder %s13, 1
      %p30 = por %p28, %p29
      %p31 = scmp.ne.s32.totalorder %s23, %s26
      %p32 = scmp.eq.s32.totalorder %s13, 0
      %p33 = por %p31, %p32
      %p34 = scmp.ne.s32.totalorder %s23, %s26
      %p35 = scmp.eq.s32.totalorder %s18, 1
      %p36 = por %p34, %p35
      %p37 = scmp.ne.s32.totalorder %s26, %s27
      %p38 = scmp.eq.s32.totalorder %s18, 0
      %p39 = por %p37, %p38
      %p40 = scmp.ne.s32.totalorder %s26, %s27
      %p41 = scmp.eq.s32.totalorder %s19, 1
      %p42 = por %p40, %p41
      %p44 = scmp.ne.s32.totalorder %s27, %s43
      %p45 = scmp.eq.s32.totalorder %s19, 0
      %p46 = por %p44, %p45
      %s47 = ssub.s32 %s13, %s20
      %p48 = scmp.eq.s32.totalorder %s47, 0
      %s50 = sadd.s32 %s49, 1
      %s51 = scalar_select %p48, %s49, %s50
      %p54 = pneg %p48
      %p55 = scmp.eq.s32.totalorder %s13, 1
      %p56 = por %p54, %p55
      %p57 = scmp.ne.s32.totalorder %s49, %s52
      %p58 = scmp.eq.s32.totalorder %s13, 0
      %p59 = por %p57, %p58
      %p60 = scmp.ne.s32.totalorder %s49, %s52
      %p61 = scmp.eq.s32.totalorder %s18, 1
      %p62 = por %p60, %p61
      %p63 = scmp.ne.s32.totalorder %s52, %s53
      %p64 = scmp.eq.s32.totalorder %s18, 0
      %p65 = por %p63, %p64
      %p66 = scmp.ne.s32.totalorder %s52, %s53
      %p67 = scmp.eq.s32.totalorder %s19, 1
      %p68 = por %p66, %p67
      %p70 = scmp.ne.s32.totalorder %s53, %s69
      %p71 = scmp.eq.s32.totalorder %s19, 0
      %p72 = por %p70, %p71
      %p73 = scmp.le.s32.totalorder 1, %s13
      %p74 = scmp.lt.s32.totalorder %s13, 3
      %p75 = pnand %p73, %p74
      %p76 = pneg %p75
      // Predicated region
      $region9: #{tpu_custom_call.1} parent=5 // pred_check
        _
      $region10: #{tpu_custom_call.1} parent=5 // pred_check_branch
        %78 = sbr.rel (%p75) target = $region12
      $region11: #{tpu_custom_call.1} parent=5 // pred_region
        %s79 = ssub.s32 %s13, 1
      $region12: #{tpu_custom_call.1} parent=5 // pred_fallthru
        _
      %p80 = scmp.lt.s32.totalorder %s13, 2
      // Predicated region
      $region13: #{tpu_custom_call.1} parent=5 // pred_check
        %p81 = pneg %p80
      $region14: #{tpu_custom_call.1} parent=5 // pred_check_branch
        %83 = sbr.rel (%p81) target = $region16
      $region15: #{tpu_custom_call.1} parent=5 // pred_region
        // Predicated region
        $region17: #{tpu_custom_call.1} parent=15 // pred_check
          %p84 = pneg %p33
        $region18: #{tpu_custom_call.1} parent=15 // pred_check_branch
          %86 = sbr.rel (%p84) target = $region20
        $region19: #{tpu_custom_call.1} parent=15 // pred_region
          %s87 = sand.u32 %s23, 1
          %s88 = scalar_lea.sflag [#allocation3], %s87
          %s89 = sand.u32 %s23, 1
          %s90 = smul.addr %s89, 8
          %s91 = scalar_lea.vmem [#allocation2], %s90
          %s93 = ssub.s32 128, 128
          %94 = vsyncadd %s88, %s93
          %s95 = smul.addr %s13, 128
          %s96 = scalar_lea.hbm %s0, %s95
          %s98 = sshll.u32 %s91, 4
          %s99 = int_to_ptr.vmem [resolvable:$true] %s98
          %101 = dma.hbm_to_vmem [thread:$0]  %s96, 128, %s99, %s88
        $region20: #{tpu_custom_call.1} parent=15 // pred_fallthru
          _
      $region16: #{tpu_custom_call.1} parent=5 // pred_fallthru
        _
      %p102 = scmp.le.s32.totalorder 1, %s13
      %p103 = scmp.lt.s32.totalorder %s13, 3
      %p104 = pnand %p102, %p103
      %p105 = pneg %p104
      // Predicated region
      $region21: #{tpu_custom_call.1} parent=5 // pred_check
        _
      $region22: #{tpu_custom_call.1} parent=5 // pred_check_branch
        %107 = sbr.rel (%p104) target = $region24
      $region23: #{tpu_custom_call.1} parent=5 // pred_region
        %s108 = ssub.s32 %s13, 1
        %s109 = sand.u32 %s26, 1
        %s110 = scalar_lea.sflag [#allocation3], %s109
        %s111 = sand.u32 %s26, 1
        %s112 = smul.addr %s111, 8
        %s113 = scalar_lea.vmem [#allocation2], %s112
        // Predicated region
        $region25: #{tpu_custom_call.1} parent=23 // pred_check
          %p114 = pneg %p39
        $region26: #{tpu_custom_call.1} parent=23 // pred_check_branch
          %116 = sbr.rel (%p114) target = $region28
        $region27: #{tpu_custom_call.1} parent=23 // pred_region
          %117 = dma.done %s110, 128
        $region28: #{tpu_custom_call.1} parent=23 // pred_fallthru
          _
        %s118 = sand.u32 %s26, 1
        %s119 = scalar_lea.sflag [#allocation3], %s118
        %s120 = sand.u32 %s26, 1
        %s121 = smul.addr %s120, 8
        %s122 = scalar_lea.vmem [#allocation2], %s121
        %p123 = pneg %p39
        %p124 = pneg %p36
        %p125 = pneg %p65
        %p126 = pneg %p62
        %s127 = sand.u32 %s52, 1
        %s128 = scalar_lea.sflag [#allocation4], %s127
        %s129 = sand.u32 %s52, 1
        %s130 = smul.addr %s129, 8
        %s131 = scalar_lea.vmem [#allocation5], %s130
        %v132 = vld [vmem:[%s113] sm:$0xff]
        %133 = vmax.xlane.f32.xlu0 %v132
        %v134 = vpop.xlane.xlu0 %133
        %v135 = vrot.slane %v134, 4
        %v136 = vmax.f32 %v134, %v135
        %v137 = vrot.slane %v136, 2
        %v138 = vmax.f32 %v136, %v137
        %v139 = vrot.slane %v138, 1
        %v140 = vmax.f32 %v138, %v139
        %141 = vmin.xlane.f32.xlu0 %v132
        %v142 = vpop.xlane.xlu0 %141
        %v143 = vrot.slane %v142, 4
        %v144 = vmin.f32 %v142, %v143
        %v145 = vrot.slane %v144, 2
        %v146 = vmin.f32 %v144, %v145
        %v147 = vrot.slane %v146, 1
        %v148 = vmin.f32 %v146, %v147
        %149 = vadd.xlane.f32.xlu0 %v132
        %v150 = vpop.xlane.xlu0 %149
        %v151 = vrot.slane %v150, 4
        %v152 = vadd.f32 %v150, %v151
        %v153 = vrot.slane %v152, 2
        %v154 = vadd.f32 %v152, %v153
        %v155 = vrot.slane %v154, 1
        %v156 = vadd.f32 %v154, %v155
        %v157 = vmul.f32 %v156, 0.0009765625
        %v158 = vsub.f32 %v140, %v148
        %v159 = vrcp.pop %v158
        %v160 = vmul.f32 1.0, %v159
        %v161 = vsub.f32 %v132, %v157
        %v162 = vmul.f32 %v161, %v160
        %163 = vst [vmem:[%s131] sm:$0xff] %v162
        %s164 = sand.u32 %s52, 1
        %s165 = scalar_lea.sflag [#allocation4], %s164
        %s166 = sand.u32 %s52, 1
        %s167 = smul.addr %s166, 8
        %s168 = scalar_lea.vmem [#allocation5], %s167
        // Predicated region
        $region29: #{tpu_custom_call.1} parent=23 // pred_check
          %p169 = pneg %p62
        $region30: #{tpu_custom_call.1} parent=23 // pred_check_branch
          %171 = sbr.rel (%p169) target = $region32
        $region31: #{tpu_custom_call.1} parent=23 // pred_region
          %s173 = ssub.s32 128, 128
          %174 = vsyncadd %s165, %s173
          %s175 = smul.addr %s18, 128
          %s176 = scalar_lea.hbm %s1, %s175
          %s178 = sshll.u32 %s168, 4
          %s179 = int_to_ptr.vmem [resolvable:$true] %s178
          %181 = dma.vmem_to_hbm [thread:$0]  %s179, 128, %s176, %s165
        $region32: #{tpu_custom_call.1} parent=23 // pred_fallthru
          _
      $region24: #{tpu_custom_call.1} parent=5 // pred_fallthru
        _
      %p182 = scmp.le.s32.totalorder 2, %s13
      // Predicated region
      $region33: #{tpu_custom_call.1} parent=5 // pred_check
        %p183 = pneg %p182
      $region34: #{tpu_custom_call.1} parent=5 // pred_check_branch
        %185 = sbr.rel (%p183) target = $region36
      $region35: #{tpu_custom_call.1} parent=5 // pred_region
        %s186 = ssub.s32 %s13, 2
        // Predicated region
        $region37: #{tpu_custom_call.1} parent=35 // pred_check
          %p187 = pneg %p68
        $region38: #{tpu_custom_call.1} parent=35 // pred_check_branch
          %189 = sbr.rel (%p187) target = $region40
        $region39: #{tpu_custom_call.1} parent=35 // pred_region
          %s190 = sand.u32 %s53, 1
          %s191 = scalar_lea.sflag [#allocation4], %s190
          %s192 = sand.u32 %s53, 1
          %s193 = smul.addr %s192, 8
          %s194 = scalar_lea.vmem [#allocation5], %s193
          %195 = dma.done %s191, 128
        $region40: #{tpu_custom_call.1} parent=35 // pred_fallthru
          _
      $region36: #{tpu_custom_call.1} parent=5 // pred_fallthru
        _
    $region6: #{tpu_custom_call.1} parent=1 // loop_footer
      %s17 = sadd.s32 1, %s13
    $region7: #{tpu_custom_call.1} parent=1 // loop_footer_branch
      %12 = sbr.rel target = $region3
    $region8: #{tpu_custom_call.1} parent=1 // loop_exit
      _
    %196 = vsyncpa [#allocation3], 1
    %s197 = scalar_lea.sflag [#allocation3], 1
    %198 = vsyncpa %s197, 1
    %199 = vsyncpa [#allocation4], 1
    %s200 = scalar_lea.sflag [#allocation4], 1
    %201 = vsyncpa %s200, 1

</llo_original>
